<compile_context>
chip_gen: v6e
topology: v6e:2x2x1
jax: 0.10.0
libtpu: 0.0.40
codegen_flags: <defaults>
</compile_context>

<pallas_src>
import functools

import jax
import jax.numpy as jnp
from jax.experimental import pallas as pl
from jax.experimental.pallas import tpu as pltpu


# ---------------------------------------------------------------------------
# helpers
# ---------------------------------------------------------------------------
def _round_up(x: int, m: int) -> int:
    return ((x + m - 1) // m) * m


def _pick_tile(n: int, target: int, *, min_tiles: int = 1) -> int:
    """n is a multiple of 128; return the largest multiple of 128 <= target that
    divides n, optionally clamped so that at least `min_tiles` tiles exist."""
    t = min(target, n)
    if min_tiles > 1 and n // 128 >= min_tiles:
        t = min(t, (n // min_tiles) // 128 * 128)
    t -= t % 128
    t = max(t, 128)
    while n % t:
        t -= 128
    return t


def _pad2(x, rows: int, cols: int):
    out = jnp.zeros((rows, cols), x.dtype)
    return out.at[: x.shape[0], : x.shape[1]].set(x)


def _pad1(x, n: int):
    return jnp.zeros((n,), x.dtype).at[: x.shape[0]].set(x)


@functools.lru_cache(maxsize=1)
def _vmem_limit_bytes() -> int:
    """Generation-aware scoped-VMEM limit: 3/4 of physical VMEM, capped at 100 MiB.
    v7x (64 MiB) -> 48 MiB; v5e/v6e (128 MiB) -> 96 MiB. Falls back to 48 MiB."""
    default_cap = 64 * 1024 * 1024
    try:
        cap = int(getattr(pltpu.get_tpu_info(), "vmem_capacity_bytes", 0)) or default_cap
    except Exception:
        cap = default_cap
    return int(min(cap * 3 // 4, 100 * 1024 * 1024))


# ---------------------------------------------------------------------------
# Pallas kernels
# ---------------------------------------------------------------------------
def _sage_layer_kernel(a_ref, xs_ref, xd_ref, dinv_ref, wl_ref, wr_ref, b_ref,
                       o_ref, acc_ref, *, apply_act: bool):
    """One bipartite SAGEConv layer for one destination node type.

    Grid = (dst tiles i [parallel], src reduction tiles k [arbitrary]).
    a_ref   : [tm, tk] int8 raw edge counts (0/1 for dedup'd graphs)
    xs_ref  : [tk, d_src] bf16 source features
    xd_ref  : [tm, d_dst] bf16 destination (root) features
    dinv_ref: [tm, 1] f32 1/deg for mean aggregation (applied in finalize)
    acc_ref accumulates A_tile @ x_src_tile in f32; finalize does the mean scaling,
    bf16 W_l/W_r projections (f32 accumulate), bias and optional leaky_relu.
    """
    k = pl.program_id(1)

    @pl.when(k == 0)
    def _():
        acc_ref[...] = jnp.zeros_like(acc_ref)

    # int8 counts -> bf16 (exact for counts <= 256) feeding the MXU; f32 accumulate.
    a_bf = a_ref[...].astype(jnp.float32).astype(jnp.bfloat16)
    acc_ref[...] += jnp.dot(a_bf, xs_ref[...], preferred_element_type=jnp.float32)

    @pl.when(k == pl.num_programs(1) - 1)
    def _():
        mean = acc_ref[...] * dinv_ref[...]            # exact f32 mean aggregation
        out = (jnp.dot(mean.astype(jnp.bfloat16), wl_ref[...],
                       preferred_element_type=jnp.float32)
               + jnp.dot(xd_ref[...], wr_ref[...],
                         preferred_element_type=jnp.float32)
               + b_ref[...])
        if apply_act:
            out = jnp.where(out >= 0, out, jnp.float32(0.01) * out)  # leaky_relu(0.01)
        o_ref[...] = out.astype(o_ref.dtype)


def _ip_decoder_kernel(hu_ref, hm_ref, o_ref):
    """Inner-product decoder on transposed embeddings.

    hu_ref / hm_ref: [C_pad, TL]  (feature on sublanes, label-edge on lanes)
    o_ref          : [1, TL]      lane-dense output
    """
    o_ref[...] = jnp.sum(hu_ref[...] * hm_ref[...], axis=0, keepdims=True)


# ---------------------------------------------------------------------------
# wrappers
# ---------------------------------------------------------------------------
def sage_layer(a_cnt, deg_inv, x_src, x_dst, w_l, w_r, b, *, apply_act,
               out_dtype=jnp.float32, tm_target=1024, tk_target=2048):
    """All inputs already zero-padded to multiples of 128:
       a_cnt [n_dst_p, n_src_p] (edge counts), deg_inv [n_dst_p],
       x_src [n_src_p, d_src_p], x_dst [n_dst_p, d_dst_p],
       w_l [d_src_p, c_p], w_r [d_dst_p, c_p], b [c_p]  ->  [n_dst_p, c_p] out_dtype."""
    n_dst, n_src = a_cnt.shape
    d_src = x_src.shape[1]
    d_dst = x_dst.shape[1]
    c = w_l.shape[1]

    vmem_limit = _vmem_limit_bytes()
    out_bytes = jnp.dtype(out_dtype).itemsize

    # Keep >=2 dst tiles when possible so both v7x TensorCores get work on the
    # "parallel" axis; otherwise the largest 128-multiple <= target dividing n_dst.
    tm = _pick_tile(n_dst, tm_target, min_tiles=2)

    # If one dst-stripe of A (int8, double-buffered) plus the whole x_src (bf16) and
    # the other per-tile buffers fit comfortably, do the reduction in one k step so
    # x_src and the weights stay VMEM-resident across dst tiles (no re-streaming).
    full_k_bytes = (2 * tm * n_src                 # A stripe (int8), double-buffered
                    + 2 * n_src * d_src * 2        # x_src (bf16), double-buffered
                    + 2 * tm * d_dst * 2           # x_dst tile (bf16)
                    + 2 * tm * c * out_bytes       # output tile
                    + tm * d_src * 4               # f32 accumulator scratch
                    + 2 * (d_src + d_dst) * c * 2) # weights (bf16)
    if full_k_bytes <= vmem_limit // 2:
        tk = n_src
    else:
        tk = _pick_tile(n_src, tk_target)

    # Dominant operand A goes int8 (exact 0/1 counts, half of bf16 traffic); features
    # bf16 for the MXU; weights bf16 (projections run as bf16 MXU matmuls, f32 acc);
    # 1/deg and bias stay f32.
    a_i8 = a_cnt.astype(jnp.int8)
    xs_bf = x_src.astype(jnp.bfloat16)
    xd_bf = x_dst.astype(jnp.bfloat16)
    dinv = deg_inv.reshape(n_dst, 1).astype(jnp.float32)
    wl_bf = w_l.astype(jnp.bfloat16)
    wr_bf = w_r.astype(jnp.bfloat16)
    b2 = b.reshape(1, c).astype(jnp.float32)

    grid = (n_dst // tm, n_src // tk)
    kern = functools.partial(_sage_layer_kernel, apply_act=apply_act)

    flops = int(2 * n_dst * n_src * d_src + 2 * n_dst * d_src * c + 2 * n_dst * d_dst * c)
    bytes_accessed = int(a_i8.size + xs_bf.size * 2 + xd_bf.size * 2 + dinv.size * 4
                         + wl_bf.size * 2 + wr_bf.size * 2 + b2.size * 4
                         + n_dst * c * out_bytes)

    return pl.pallas_call(
        kern,
        out_shape=jax.ShapeDtypeStruct((n_dst, c), out_dtype),
        grid=grid,
        in_specs=[
            pl.BlockSpec((tm, tk), lambda i, k: (i, k)),       # A tile (int8 counts)
            pl.BlockSpec((tk, d_src), lambda i, k: (k, 0)),    # x_src tile
            pl.BlockSpec((tm, d_dst), lambda i, k: (i, 0)),    # x_dst tile (root term)
            pl.BlockSpec((tm, 1), lambda i, k: (i, 0)),        # 1/deg (mean agg)
            pl.BlockSpec((d_src, c), lambda i, k: (0, 0)),     # W_l (bf16)
            pl.BlockSpec((d_dst, c), lambda i, k: (0, 0)),     # W_r (bf16)
            pl.BlockSpec((1, c), lambda i, k: (0, 0)),         # bias (f32)
        ],
        out_specs=pl.BlockSpec((tm, c), lambda i, k: (i, 0)),  # resident across k
        scratch_shapes=[pltpu.VMEM((tm, d_src), jnp.float32)],
        compiler_params=pltpu.CompilerParams(
            dimension_semantics=("parallel", "arbitrary"),
            vmem_limit_bytes=vmem_limit,
        ),
        cost_estimate=pl.CostEstimate(flops=flops, transcendentals=0,
                                      bytes_accessed=bytes_accessed),
    )(a_i8, xs_bf, xd_bf, dinv, wl_bf, wr_bf, b2)


def ip_decoder(h_user_t, h_movie_t):
    """h_*_t: [C_pad, L_pad] transposed gathered embeddings -> [L_pad] inner products."""
    c, l = h_user_t.shape
    tl = _pick_tile(l, 2048)
    out = pl.pallas_call(
        _ip_decoder_kernel,
        out_shape=jax.ShapeDtypeStruct((1, l), jnp.float32),
        grid=(l // tl,),
        in_specs=[pl.BlockSpec((c, tl), lambda j: (0, j)),
                  pl.BlockSpec((c, tl), lambda j: (0, j))],
        out_specs=pl.BlockSpec((1, tl), lambda j: (0, j)),
        compiler_params=pltpu.CompilerParams(
            dimension_semantics=("parallel",),
            vmem_limit_bytes=_vmem_limit_bytes()),
    )(h_user_t.astype(jnp.float32), h_movie_t.astype(jnp.float32))
    return out[0]


# ---------------------------------------------------------------------------
# model: parameter init + forward (glue in plain JAX, hot path in Pallas)
# ---------------------------------------------------------------------------
def init_params(key, num_layers, user_dim, movie_dim, channels):
    """Per layer: u->m conv (W_l [user_dim,C], W_r [movie_dim,C], b) and
                  m->u conv (W_l [movie_dim,C], W_r [user_dim,C], b)."""
    params = []
    for layer in range(num_layers):
        du, dm = (user_dim, movie_dim) if layer == 0 else (channels, channels)
        key, *ks = jax.random.split(key, 5)

        def glorot(k, fan_in, fan_out):
            lim = jnp.sqrt(6.0 / (fan_in + fan_out))
            return jax.random.uniform(k, (fan_in, fan_out), jnp.float32, -lim, lim)

        params.append(dict(
            m_wl=glorot(ks[0], du, channels),   # user -> movie, neighbor transform
            m_wr=glorot(ks[1], dm, channels),   # user -> movie, root transform
            m_b=jnp.zeros((channels,), jnp.float32),
            u_wl=glorot(ks[2], dm, channels),   # movie -> user, neighbor transform
            u_wr=glorot(ks[3], du, channels),   # movie -> user, root transform
            u_b=jnp.zeros((channels,), jnp.float32),
        ))
    return params


def build_adjacency(edge_index, n_dst, n_src, n_dst_p=None, n_src_p=None):
    """Raw edge-count adjacency [n_dst_p, n_src_p] (int8, zero-padded) and per-dst
    1/deg [n_dst_p] (f32).  Duplicate edges add like PyG scatter-mean; int8 counts
    are exact up to 127 parallel edges per (dst, src) pair."""
    n_dst_p = n_dst if n_dst_p is None else n_dst_p
    n_src_p = n_src if n_src_p is None else n_src_p
    src, dst = edge_index[0], edge_index[1]
    a = jnp.zeros((n_dst_p, n_src_p), jnp.float32).at[dst, src].add(1.0)
    deg_inv = 1.0 / jnp.maximum(a.sum(axis=1), 1.0)
    return a.astype(jnp.int8), deg_inv


def gnn_forward(params, x_user, x_movie, edge_index_um, edge_label_index):
    """x_user [Nu,Du], x_movie [Nm,Dm], edge_index_um [2,E] (row0=user, row1=movie),
       edge_label_index [2,L] -> [L] predicted scores."""
    nu, du = x_user.shape
    nm, dm = x_movie.shape
    channels = params[0]["m_b"].shape[0]

    nu_p, nm_p = _round_up(nu, 128), _round_up(nm, 128)
    du_p, dm_p = _round_up(du, 128), _round_up(dm, 128)
    c_p = _round_up(channels, 128)

    # ('user','watched','movie') -> messages into movies;  reverse -> messages into users.
    a_mu, dinv_m = build_adjacency(edge_index_um, nm, nu, nm_p, nu_p)
    rev = jnp.stack([edge_index_um[1], edge_index_um[0]])
    a_um, dinv_u = build_adjacency(rev, nu, nm, nu_p, nm_p)

    h_u = _pad2(x_user.astype(jnp.float32), nu_p, du_p)
    h_m = _pad2(x_movie.astype(jnp.float32), nm_p, dm_p)

    num_layers = len(params)
    for i, p in enumerate(params):
        last = i == num_layers - 1
        act = not last
        # Hidden layers in bf16 (next layer consumes bf16 anyway); last layer f32 for
        # the decoder.  NOTE: padded dst rows equal (leaky_relu'd) bias — never read.
        out_dtype = jnp.float32 if last else jnp.bfloat16
        d_u, d_m = h_u.shape[1], h_m.shape[1]
        new_m = sage_layer(a_mu, dinv_m, h_u, h_m,
                           _pad2(p["m_wl"], d_u, c_p),
                           _pad2(p["m_wr"], d_m, c_p),
                           _pad1(p["m_b"], c_p), apply_act=act, out_dtype=out_dtype)
        new_u = sage_layer(a_um, dinv_u, h_m, h_u,
                           _pad2(p["u_wl"], d_m, c_p),
                           _pad2(p["u_wr"], d_u, c_p),
                           _pad1(p["u_b"], c_p), apply_act=act, out_dtype=out_dtype)
        h_u, h_m = new_u, new_m

    users_idx, movies_idx = edge_label_index[0], edge_label_index[1]
    l = int(users_idx.shape[0])
    l_p = _round_up(l, 128)
    # Gather + transpose in plain JAX so the decoder kernel output is lane-dense.
    # TODO(synk): fuse this gather into the decoder kernel via PrefetchScalarGridSpec
    #             + pl.Element row gather for very large L.
    hu_t = jnp.zeros((c_p, l_p), jnp.float32).at[:, :l].set(h_u[users_idx].T)
    hm_t = jnp.zeros((c_p, l_p), jnp.float32).at[:, :l].set(h_m[movies_idx].T)
    return ip_decoder(hu_t, hm_t)[:l]


# ---------------------------------------------------------------------------
if __name__ == "__main__":
    key = jax.random.PRNGKey(0)
    k_feat_u, k_feat_m, k_edges, k_lbl_u, k_lbl_m, k_params = jax.random.split(key, 6)

    NUM_LAYERS = 2
    USER_DIM, MOVIE_DIM, HIDDEN = 12, 20, 32
    N_USERS, N_MOVIES = 8, 16
    N_EDGES, N_LABELS = 40, 16

    x_user = jax.random.normal(k_feat_u, (N_USERS, USER_DIM), jnp.float32)
    x_movie = jax.random.normal(k_feat_m, (N_MOVIES, MOVIE_DIM), jnp.float32)

    e_users = jax.random.randint(k_edges, (N_EDGES,), 0, N_USERS)
    e_movies = jax.random.randint(jax.random.fold_in(k_edges, 1), (N_EDGES,), 0, N_MOVIES)
    edge_index_um = jnp.stack([e_users, e_movies]).astype(jnp.int32)

    lbl_users = jax.random.randint(k_lbl_u, (N_LABELS,), 0, N_USERS)
    lbl_movies = jax.random.randint(k_lbl_m, (N_LABELS,), 0, N_MOVIES)
    edge_label_index = jnp.stack([lbl_users, lbl_movies]).astype(jnp.int32)

    params = init_params(k_params, NUM_LAYERS, USER_DIM, MOVIE_DIM, HIDDEN)

    scores = gnn_forward(params, x_user, x_movie, edge_index_um, edge_label_index)
    scores = jax.block_until_ready(scores)

    # Pure-JAX reference with the same precision choices as the kernels:
    # exact int-count adjacency, f32 mean, bf16 MXU operands with f32 accumulation.
    def ref_forward():
        def bf(x):
            return x.astype(jnp.bfloat16)

        def raw_adj(ei, n_dst, n_src):
            a = jnp.zeros((n_dst, n_src), jnp.float32).at[ei[1], ei[0]].add(1.0)
            dinv = 1.0 / jnp.maximum(a.sum(axis=1, keepdims=True), 1.0)
            return a, dinv

        a_mu, dinv_m = raw_adj(edge_index_um, N_MOVIES, N_USERS)
        a_um, dinv_u = raw_adj(jnp.stack([edge_index_um[1], edge_index_um[0]]),
                               N_USERS, N_MOVIES)
        h_u, h_m = x_user, x_movie
        for i, p in enumerate(params):
            agg_m = jnp.dot(bf(a_mu), bf(h_u), preferred_element_type=jnp.float32) * dinv_m
            agg_u = jnp.dot(bf(a_um), bf(h_m), preferred_element_type=jnp.float32) * dinv_u
            new_m = (jnp.dot(bf(agg_m), bf(p["m_wl"]), preferred_element_type=jnp.float32)
                     + jnp.dot(bf(h_m), bf(p["m_wr"]), preferred_element_type=jnp.float32)
                     + p["m_b"])
            new_u = (jnp.dot(bf(agg_u), bf(p["u_wl"]), preferred_element_type=jnp.float32)
                     + jnp.dot(bf(h_u), bf(p["u_wr"]), preferred_element_type=jnp.float32)
                     + p["u_b"])
            if i != len(params) - 1:
                new_m = jnp.where(new_m >= 0, new_m, 0.01 * new_m)
                new_u = jnp.where(new_u >= 0, new_u, 0.01 * new_u)
            h_u, h_m = new_u, new_m
        return jnp.sum(h_u[edge_label_index[0]] * h_m[edge_label_index[1]], axis=-1)

    ref = jax.block_until_ready(ref_forward())
    assert scores.shape == (N_LABELS,)
    assert jnp.allclose(scores, ref, atol=1e-2, rtol=1e-2), (scores, ref)
    print("KERNEL_OK")
</pallas_src>

<mosaic_0001>
module attributes {stable_mosaic.version = 11 : i64} {
  func.func @_sage_layer_kernel(%arg0: i32, %arg1: i32, %arg2: memref<128x128xi8, #tpu.memory_space<vmem>>, %arg3: memref<128x128xbf16, #tpu.memory_space<vmem>>, %arg4: memref<128x128xbf16, #tpu.memory_space<vmem>>, %arg5: memref<128x1xf32, #tpu.memory_space<vmem>>, %arg6: memref<128x128xbf16, #tpu.memory_space<vmem>>, %arg7: memref<128x128xbf16, #tpu.memory_space<vmem>>, %arg8: memref<1x128xf32, #tpu.memory_space<vmem>>, %arg9: memref<128x128xbf16, #tpu.memory_space<vmem>>, %arg10: memref<128x128xf32, #tpu.memory_space<vmem>>) attributes {dimension_semantics = [#tpu.dimension_semantics<parallel>, #tpu.dimension_semantics<arbitrary>], iteration_bounds = array<i64: 1, 1>, scalar_prefetch = 0 : i64, scratch_operands = 1 : i64, tpu.core_type = #tpu.core_type<tc>, window_params = [{transform_indices = @transform_0, window_bounds = array<i64: 128, 128>}, {transform_indices = @transform_1, window_bounds = array<i64: 128, 128>}, {transform_indices = @transform_2, window_bounds = array<i64: 128, 128>}, {transform_indices = @transform_3, window_bounds = array<i64: 128, 1>}, {pipeline_mode = #tpu.pipeline_mode<synchronous>, transform_indices = @transform_4, window_bounds = array<i64: 128, 128>}, {pipeline_mode = #tpu.pipeline_mode<synchronous>, transform_indices = @transform_5, window_bounds = array<i64: 128, 128>}, {pipeline_mode = #tpu.pipeline_mode<synchronous>, transform_indices = @transform_6, window_bounds = array<i64: 1, 128>}, {transform_indices = @transform_7, window_bounds = array<i64: 128, 128>}]} {
    %c0_i32 = arith.constant 0 : i32
    %0 = arith.cmpi eq, %arg1, %c0_i32 : i32
    %1 = arith.extui %0 : i1 to i32
    %c0_i32_0 = arith.constant 0 : i32
    %2 = arith.cmpi ne, %1, %c0_i32_0 : i32
    scf.if %2 {
      %cst_10 = arith.constant 0.000000e+00 : f32
      %14 = vector.broadcast %cst_10 : f32 to vector<128x128xf32>
      %c0_11 = arith.constant 0 : index
      %c0_12 = arith.constant 0 : index
      %15 = vector.load %arg10[%c0_11, %c0_12] : memref<128x128xf32, #tpu.memory_space<vmem>>, vector<128x128xf32>
      tpu.vector_store %arg10[%c0_11, %c0_12], %14 {strides = array<i32>} : memref<128x128xf32, #tpu.memory_space<vmem>>, vector<128x128xf32>,
    } else {
    }
    %c0 = arith.constant 0 : index
    %c0_1 = arith.constant 0 : index
    %3 = vector.load %arg2[%c0, %c0_1] : memref<128x128xi8, #tpu.memory_space<vmem>>, vector<128x128xi8>
    %4 = arith.sitofp %3 : vector<128x128xi8> to vector<128x128xf32>
    %5 = arith.truncf %4 : vector<128x128xf32> to vector<128x128xbf16>
    %c0_2 = arith.constant 0 : index
    %c0_3 = arith.constant 0 : index
    %6 = vector.load %arg10[%c0_2, %c0_3] : memref<128x128xf32, #tpu.memory_space<vmem>>, vector<128x128xf32>
    %c0_4 = arith.constant 0 : index
    %c0_5 = arith.constant 0 : index
    %7 = vector.load %arg3[%c0_4, %c0_5] : memref<128x128xbf16, #tpu.memory_space<vmem>>, vector<128x128xbf16>
    %cst = arith.constant dense<0.000000e+00> : vector<128x128xf32>
    %8 = tpu.matmul %5, %7, %cst {dimension_numbers = #tpu.dot_dimension_numbers<[1], [0], [0], [1], [0, 0, 1, 1], [], []>} : vector<128x128xbf16>, vector<128x128xbf16>, vector<128x128xf32> -> vector<128x128xf32>
    %9 = arith.addf %6, %8 : vector<128x128xf32>
    %c0_6 = arith.constant 0 : index
    %c0_7 = arith.constant 0 : index
    %10 = vector.load %arg10[%c0_6, %c0_7] : memref<128x128xf32, #tpu.memory_space<vmem>>, vector<128x128xf32>
    tpu.vector_store %arg10[%c0_6, %c0_7], %9 {strides = array<i32>} : memref<128x128xf32, #tpu.memory_space<vmem>>, vector<128x128xf32>,
    %c0_i32_8 = arith.constant 0 : i32
    %11 = arith.cmpi eq, %arg1, %c0_i32_8 : i32
    %12 = arith.extui %11 : i1 to i32
    %c0_i32_9 = arith.constant 0 : i32
    %13 = arith.cmpi ne, %12, %c0_i32_9 : i32
    scf.if %13 {
      %c0_10 = arith.constant 0 : index
      %c0_11 = arith.constant 0 : index
      %14 = vector.load %arg10[%c0_10, %c0_11] : memref<128x128xf32, #tpu.memory_space<vmem>>, vector<128x128xf32>
      %c0_12 = arith.constant 0 : index
      %c0_13 = arith.constant 0 : index
      %15 = vector.load %arg5[%c0_12, %c0_13] : memref<128x1xf32, #tpu.memory_space<vmem>>, vector<128x1xf32>
      %16 = vector.broadcast %15 : vector<128x1xf32> to vector<128x128xf32>
      %17 = arith.mulf %14, %16 : vector<128x128xf32>
      %18 = arith.truncf %17 : vector<128x128xf32> to vector<128x128xbf16>
      %c0_14 = arith.constant 0 : index
      %c0_15 = arith.constant 0 : index
      %19 = vector.load %arg6[%c0_14, %c0_15] : memref<128x128xbf16, #tpu.memory_space<vmem>>, vector<128x128xbf16>
      %cst_16 = arith.constant dense<0.000000e+00> : vector<128x128xf32>
      %20 = tpu.matmul %18, %19, %cst_16 {dimension_numbers = #tpu.dot_dimension_numbers<[1], [0], [0], [1], [0, 0, 1, 1], [], []>} : vector<128x128xbf16>, vector<128x128xbf16>, vector<128x128xf32> -> vector<128x128xf32>
      %c0_17 = arith.constant 0 : index
      %c0_18 = arith.constant 0 : index
      %21 = vector.load %arg4[%c0_17, %c0_18] : memref<128x128xbf16, #tpu.memory_space<vmem>>, vector<128x128xbf16>
      %c0_19 = arith.constant 0 : index
      %c0_20 = arith.constant 0 : index
      %22 = vector.load %arg7[%c0_19, %c0_20] : memref<128x128xbf16, #tpu.memory_space<vmem>>, vector<128x128xbf16>
      %cst_21 = arith.constant dense<0.000000e+00> : vector<128x128xf32>
      %23 = tpu.matmul %21, %22, %cst_21 {dimension_numbers = #tpu.dot_dimension_numbers<[1], [0], [0], [1], [0, 0, 1, 1], [], []>} : vector<128x128xbf16>, vector<128x128xbf16>, vector<128x128xf32> -> vector<128x128xf32>
      %24 = arith.addf %20, %23 : vector<128x128xf32>
      %c0_22 = arith.constant 0 : index
      %c0_23 = arith.constant 0 : index
      %25 = vector.load %arg8[%c0_22, %c0_23] : memref<1x128xf32, #tpu.memory_space<vmem>>, vector<1x128xf32>
      %26 = vector.broadcast %25 : vector<1x128xf32> to vector<128x128xf32>
      %27 = arith.addf %24, %26 : vector<128x128xf32>
      %cst_24 = arith.constant 0.000000e+00 : f32
      %28 = vector.broadcast %cst_24 : f32 to vector<128x128xf32>
      %29 = arith.cmpf oge, %27, %28 : vector<128x128xf32>
      %cst_25 = arith.constant 0.00999999977 : f32
      %30 = vector.broadcast %cst_25 : f32 to vector<128x128xf32>
      %31 = arith.mulf %30, %27 : vector<128x128xf32>
      %32 = arith.select %29, %27, %31 : vector<128x128xi1>, vector<128x128xf32>
      %33 = arith.truncf %32 : vector<128x128xf32> to vector<128x128xbf16>
      %c0_26 = arith.constant 0 : index
      %c0_27 = arith.constant 0 : index
      %34 = vector.load %arg9[%c0_26, %c0_27] : memref<128x128xbf16, #tpu.memory_space<vmem>>, vector<128x128xbf16>
      tpu.vector_store %arg9[%c0_26, %c0_27], %33 {strides = array<i32>} : memref<128x128xbf16, #tpu.memory_space<vmem>>, vector<128x128xbf16>,
    } else {
    }
    return
  }
  func.func @transform_0(%arg0: i32, %arg1: i32) -> (i32, i32) {
    %c0_i32 = arith.constant 0 : i32
    return %arg0, %arg1 : i32, i32
  }
  func.func @transform_1(%arg0: i32, %arg1: i32) -> (i32, i32) {
    %c0_i32 = arith.constant 0 : i32
    %c0_i32_0 = arith.constant 0 : i32
    return %arg1, %c0_i32 : i32, i32
  }
  func.func @transform_2(%arg0: i32, %arg1: i32) -> (i32, i32) {
    %c0_i32 = arith.constant 0 : i32
    %c0_i32_0 = arith.constant 0 : i32
    return %arg0, %c0_i32 : i32, i32
  }
  func.func @transform_3(%arg0: i32, %arg1: i32) -> (i32, i32) {
    %c0_i32 = arith.constant 0 : i32
    %c0_i32_0 = arith.constant 0 : i32
    return %arg0, %c0_i32 : i32, i32
  }
  func.func @transform_4(%arg0: i32, %arg1: i32) -> (i32, i32) {
    %c0_i32 = arith.constant 0 : i32
    %c0_i32_0 = arith.constant 0 : i32
    %c0_i32_1 = arith.constant 0 : i32
    return %c0_i32, %c0_i32_0 : i32, i32
  }
  func.func @transform_5(%arg0: i32, %arg1: i32) -> (i32, i32) {
    %c0_i32 = arith.constant 0 : i32
    %c0_i32_0 = arith.constant 0 : i32
    %c0_i32_1 = arith.constant 0 : i32
    return %c0_i32, %c0_i32_0 : i32, i32
  }
  func.func @transform_6(%arg0: i32, %arg1: i32) -> (i32, i32) {
    %c0_i32 = arith.constant 0 : i32
    %c0_i32_0 = arith.constant 0 : i32
    %c0_i32_1 = arith.constant 0 : i32
    return %c0_i32, %c0_i32_0 : i32, i32
  }
  func.func @transform_7(%arg0: i32, %arg1: i32) -> (i32, i32) {
    %c0_i32 = arith.constant 0 : i32
    %c0_i32_0 = arith.constant 0 : i32
    return %arg0, %c0_i32 : i32, i32
  }
}

</mosaic_0001>

<llo_original>
// kernel: tpu_custom_call.1
$region0: #{tpu_custom_call.1}
  #allocation0 [shape = 'u32[]', space=smem, size = 0x4, offset = 0x4, fixed_abs, tag = 'smem constant byte address 0x4 - core index']
  #allocation1 [shape = 'u32[144,128]{1,0:T(1,128)}', space=vmem, size = 0x12000, scoped, tag = 'internal scratch']
  #allocation2 [shape = 'f32[128,128]{1,0:T(8,128)}', space=vmem, size = 0x10000, scoped, tag = 'scratch operand']
  %s0 = inlined_call_operand.hbm [shape: s8[128,128], index: 0, kind: input, shape index: {}]
  %s1 = inlined_call_operand.vmem [shape: bf16[128,128], index: 1, kind: input, shape index: {}]
  %s2 = inlined_call_operand.vmem [shape: bf16[128,128], index: 2, kind: input, shape index: {}]
  %s3 = inlined_call_operand.vmem [shape: f32[128,1], index: 3, kind: input, shape index: {}]
  %s4 = inlined_call_operand.hbm [shape: bf16[128,128], index: 4, kind: input, shape index: {}]
  %s5 = inlined_call_operand.hbm [shape: bf16[128,128], index: 5, kind: input, shape index: {}]
  %s6 = inlined_call_operand.vmem [shape: f32[1,128], index: 6, kind: input, shape index: {}]
  %s7 = inlined_call_operand.hbm [shape: bf16[128,128], index: 7, kind: output, shape index: {}]
  %s8 = sld [smem:[#allocation0]]
  $region58: #{tpu_custom_call.1} parent=0
    _
  %s10 = ssub.s32 1, %s8
  %s11 = scalar_select 0, %s10, %s8
  $region1: #{tpu_custom_call.1} parent=0
    #allocation3 [shape = 'u8[16384]{0}', space=vmem, size = 0x4000, scoped, tag = 'input window, operand 0, single buffered']
    #allocation4 [shape = 's32[1]{0}', space=sflag, size = 0x4, scoped, tag = 'scoped memory for tpu_custom_call.1']
    #allocation5 [shape = 's32[1]{0}', space=sflag, size = 0x4, scoped, tag = 'scoped memory for tpu_custom_call.1']
    #allocation6 [shape = 'u8[32768]{0}', space=vmem, size = 0x8000, scoped, tag = 'input window, operand 4, single buffered']
    #allocation7 [shape = 's32[1]{0}', space=sflag, size = 0x4, scoped, tag = 'scoped memory for tpu_custom_call.1']
    #allocation8 [shape = 'u8[32768]{0}', space=vmem, size = 0x8000, scoped, tag = 'input window, operand 5, single buffered']
    #allocation9 [shape = 'u8[32768]{0}', space=vmem, size = 0x8000, scoped, tag = 'output window, operand 0, single buffered']
    %12 = vsyncpa [#allocation4], 0
    %13 = vsyncpa [#allocation7], 0
    %14 = vsyncpa [#allocation5], 0
    // Predicated region
    $region2: #{tpu_custom_call.1} parent=1 // pred_check
      _
    $region3: #{tpu_custom_call.1} parent=1 // pred_check_branch
      %16 = sbr.rel (0) target = $region5
    $region4: #{tpu_custom_call.1} parent=1 // pred_region
      %s18 = ssub.s32 512, 512
      %19 = vsyncadd [#allocation4], %s18
      %s20 = sshll.u32 [#allocation3], 4
      %s21 = int_to_ptr.vmem [resolvable:$true] %s20
      %26 = dma.hbm_to_vmem [thread:$0]  %s0, 512, %s21, [#allocation4], 128, 128, 8
    $region5: #{tpu_custom_call.1} parent=1 // pred_fallthru
      _
    // Predicated region
    $region6: #{tpu_custom_call.1} parent=1 // pred_check
      _
    $region7: #{tpu_custom_call.1} parent=1 // pred_check_branch
      %28 = sbr.rel (0) target = $region9
    $region8: #{tpu_custom_call.1} parent=1 // pred_region
      _
    $region9: #{tpu_custom_call.1} parent=1 // pred_fallthru
      _
    // Predicated region
    $region10: #{tpu_custom_call.1} parent=1 // pred_check
      _
    $region11: #{tpu_custom_call.1} parent=1 // pred_check_branch
      %30 = sbr.rel (0) target = $region13
    $region12: #{tpu_custom_call.1} parent=1 // pred_region
      _
    $region13: #{tpu_custom_call.1} parent=1 // pred_fallthru
      _
    // Predicated region
    $region14: #{tpu_custom_call.1} parent=1 // pred_check
      _
    $region15: #{tpu_custom_call.1} parent=1 // pred_check_branch
      %32 = sbr.rel (0) target = $region17
    $region16: #{tpu_custom_call.1} parent=1 // pred_region
      _
    $region17: #{tpu_custom_call.1} parent=1 // pred_fallthru
      _
    // Predicated region
    $region18: #{tpu_custom_call.1} parent=1 // pred_check
      _
    $region19: #{tpu_custom_call.1} parent=1 // pred_check_branch
      %34 = sbr.rel (0) target = $region21
    $region20: #{tpu_custom_call.1} parent=1 // pred_region
      %s36 = ssub.s32 1024, 1024
      %37 = vsyncadd [#allocation7], %s36
      %s38 = sshll.u32 [#allocation6], 4
      %s39 = int_to_ptr.vmem [resolvable:$true] %s38
      %44 = dma.hbm_to_vmem [thread:$0]  %s4, 1024, %s39, [#allocation7], 64, 64, 4
    $region21: #{tpu_custom_call.1} parent=1 // pred_fallthru
      _
    // Predicated region
    $region22: #{tpu_custom_call.1} parent=1 // pred_check
      _
    $region23: #{tpu_custom_call.1} parent=1 // pred_check_branch
      %46 = sbr.rel (0) target = $region25
    $region24: #{tpu_custom_call.1} parent=1 // pred_region
      %s48 = ssub.s32 1024, 1024
      %49 = vsyncadd [#allocation7], %s48
      %s50 = sshll.u32 [#allocation8], 4
      %s51 = int_to_ptr.vmem [resolvable:$true] %s50
      %56 = dma.hbm_to_vmem [thread:$0]  %s5, 1024, %s51, [#allocation7], 64, 64, 4
    $region25: #{tpu_custom_call.1} parent=1 // pred_fallthru
      _
    // Predicated region
    $region26: #{tpu_custom_call.1} parent=1 // pred_check
      _
    $region27: #{tpu_custom_call.1} parent=1 // pred_check_branch
      %58 = sbr.rel (0) target = $region29
    $region28: #{tpu_custom_call.1} parent=1 // pred_region
      _
    $region29: #{tpu_custom_call.1} parent=1 // pred_fallthru
      _
    // Predicated region
    $region30: #{tpu_custom_call.1} parent=1 // pred_check
      _
    $region31: #{tpu_custom_call.1} parent=1 // pred_check_branch
      %60 = sbr.rel (0) target = $region33
    $region32: #{tpu_custom_call.1} parent=1 // pred_region
      %61 = dma.done [#allocation4], 512
    $region33: #{tpu_custom_call.1} parent=1 // pred_fallthru
      _
    // Predicated region
    $region34: #{tpu_custom_call.1} parent=1 // pred_check
      _
    $region35: #{tpu_custom_call.1} parent=1 // pred_check_branch
      %63 = sbr.rel (0) target = $region37
    $region36: #{tpu_custom_call.1} parent=1 // pred_region
      %64 = dma.done [#allocation7], 1024
    $region37: #{tpu_custom_call.1} parent=1 // pred_fallthru
      _
    // Predicated region
    $region38: #{tpu_custom_call.1} parent=1 // pred_check
      _
    $region39: #{tpu_custom_call.1} parent=1 // pred_check_branch
      %66 = sbr.rel (0) target = $region41
    $region40: #{tpu_custom_call.1} parent=1 // pred_region
      %67 = dma.done [#allocation7], 1024
    $region41: #{tpu_custom_call.1} parent=1 // pred_fallthru
      _
    %p69 = scmp.eq.s32.totalorder 0, 0
    // Predicated region
    $region42: #{tpu_custom_call.1} parent=1 // pred_check
      %p70 = pneg %p69
    $region43: #{tpu_custom_call.1} parent=1 // pred_check_branch
      %72 = sbr.rel (%p70) target = $region45
    $region44: #{tpu_custom_call.1} parent=1 // pred_region
      %73 = vst [vmem:[#allocation2] sm:$0xff] 0.0
      %74 = vst [vmem:[#allocation2 + $0x8] sm:$0xff] 0.0
      %75 = vst [vmem:[#allocation2 + $0x10] sm:$0xff] 0.0
      %76 = vst [vmem:[#allocation2 + $0x18] sm:$0xff] 0.0
      %77 = vst [vmem:[#allocation2 + $0x20] sm:$0xff] 0.0
      %78 = vst [vmem:[#allocation2 + $0x28] sm:$0xff] 0.0
      %79 = vst [vmem:[#allocation2 + $0x30] sm:$0xff] 0.0
      %80 = vst [vmem:[#allocation2 + $0x38] sm:$0xff] 0.0
      %81 = vst [vmem:[#allocation2 + $0x40] sm:$0xff] 0.0
      %82 = vst [vmem:[#allocation2 + $0x48] sm:$0xff] 0.0
      %83 = vst [vmem:[#allocation2 + $0x50] sm:$0xff] 0.0
      %84 = vst [vmem:[#allocation2 + $0x58] sm:$0xff] 0.0
      %85 = vst [vmem:[#allocation2 + $0x60] sm:$0xff] 0.0
      %86 = vst [vmem:[#allocation2 + $0x68] sm:$0xff] 0.0
      %87 = vst [vmem:[#allocation2 + $0x70] sm:$0xff] 0.0
      %88 = vst [vmem:[#allocation2 + $0x78] sm:$0xff] 0.0
    $region45: #{tpu_custom_call.1} parent=1 // pred_fallthru
      _
    %v89 = vld [vmem:[#allocation3] sm:$0xff]
    %v90 = vld [vmem:[#allocation3 + $0x8] sm:$0xff]
    %v91 = vld [vmem:[#allocation3 + $0x10] sm:$0xff]
    %v92 = vld [vmem:[#allocation3 + $0x18] sm:$0xff]
    %v93 = vunpack.c.l.s8.bf16 %v89
    %v94 = vunpack.c.h.s8.bf16 %v89
    %v95 = vunpack.c.l.s8.bf16 %v90
    %v96 = vunpack.c.h.s8.bf16 %v90
    %v97 = vunpack.c.l.s8.bf16 %v91
    %v98 = vunpack.c.h.s8.bf16 %v91
    %v99 = vunpack.c.l.s8.bf16 %v92
    %v100 = vunpack.c.h.s8.bf16 %v92
    %v101 = vld [vmem:[#allocation2] sm:$0xff]
    %v102 = vld [vmem:[#allocation2 + $0x8] sm:$0xff]
    %v103 = vld [vmem:[#allocation2 + $0x10] sm:$0xff]
    %v104 = vld [vmem:[#allocation2 + $0x18] sm:$0xff]
    %v105 = vld [vmem:[#allocation2 + $0x20] sm:$0xff]
    %v106 = vld [vmem:[#allocation2 + $0x28] sm:$0xff]
    %v107 = vld [vmem:[#allocation2 + $0x30] sm:$0xff]
    %v108 = vld [vmem:[#allocation2 + $0x38] sm:$0xff]
    %v109 = vld [vmem:[#allocation2 + $0x40] sm:$0xff]
    %v110 = vld [vmem:[#allocation2 + $0x48] sm:$0xff]
    %v111 = vld [vmem:[#allocation2 + $0x50] sm:$0xff]
    %v112 = vld [vmem:[#allocation2 + $0x58] sm:$0xff]
    %v113 = vld [vmem:[#allocation2 + $0x60] sm:$0xff]
    %v114 = vld [vmem:[#allocation2 + $0x68] sm:$0xff]
    %v115 = vld [vmem:[#allocation2 + $0x70] sm:$0xff]
    %v116 = vld [vmem:[#allocation2 + $0x78] sm:$0xff]
    %v117 = vld [vmem:[%s1] sm:$0xf]
    %v118 = vld [vmem:[%s1 + $0x4] sm:$0xf]
    %v119 = vld [vmem:[%s1 + $0x8] sm:$0xf]
    %v120 = vld [vmem:[%s1 + $0xc] sm:$0xf]
    %v121 = vld [vmem:[%s1 + $0x10] sm:$0xf]
    %v122 = vld [vmem:[%s1 + $0x14] sm:$0xf]
    %v123 = vld [vmem:[%s1 + $0x18] sm:$0xf]
    %v124 = vld [vmem:[%s1 + $0x1c] sm:$0xf]
    %v125 = vld [vmem:[%s1 + $0x20] sm:$0xf]
    %v126 = vld [vmem:[%s1 + $0x24] sm:$0xf]
    %v127 = vld [vmem:[%s1 + $0x28] sm:$0xf]
    %v128 = vld [vmem:[%s1 + $0x2c] sm:$0xf]
    %v129 = vld [vmem:[%s1 + $0x30] sm:$0xf]
    %v130 = vld [vmem:[%s1 + $0x34] sm:$0xf]
    %v131 = vld [vmem:[%s1 + $0x38] sm:$0xf]
    %v132 = vld [vmem:[%s1 + $0x3c] sm:$0xf]
    %v149 = vunpack.c.l.b16 %v117
    %v150 = vunpack.c.l.b16 %v118
    %v151 = vunpack.c.l.b16 %v119
    %v152 = vunpack.c.l.b16 %v120
    %v153 = vunpack.c.l.b16 %v121
    %v154 = vunpack.c.l.b16 %v122
    %v155 = vunpack.c.l.b16 %v123
    %v156 = vunpack.c.l.b16 %v124
    %v157 = vunpack.c.l.b16 %v125
    %v158 = vunpack.c.l.b16 %v126
    %v159 = vunpack.c.l.b16 %v127
    %v160 = vunpack.c.l.b16 %v128
    %v161 = vunpack.c.l.b16 %v129
    %v162 = vunpack.c.l.b16 %v130
    %v163 = vunpack.c.l.b16 %v131
    %v164 = vunpack.c.l.b16 %v132
    %v165 = vpack.c.b16 %v150, %v149
    %v166 = vpack.c.b16 %v152, %v151
    %v167 = vpack.c.b16 %v154, %v153
    %v168 = vpack.c.b16 %v156, %v155
    %v169 = vpack.c.b16 %v158, %v157
    %v170 = vpack.c.b16 %v160, %v159
    %v171 = vpack.c.b16 %v162, %v161
    %v172 = vpack.c.b16 %v164, %v163
    %181 = vmatprep.subr.bf16.mxu0 0
    %182 = vmatpush1.bf16.msra.mxu0 %v172
    %183 = vmatprep.subr.bf16.mxu0 0
    %184 = vmatpush1.bf16.msra.mxu0 %v171
    %185 = vmatprep.subr.bf16.mxu0 0
    %186 = vmatpush1.bf16.msra.mxu0 %v170
    %187 = vmatprep.subr.bf16.mxu0 0
    %188 = vmatpush1.bf16.msra.mxu0 %v169
    %189 = vmatprep.subr.bf16.mxu0 0
    %190 = vmatpush1.bf16.msra.mxu0 %v168
    %191 = vmatprep.subr.bf16.mxu0 0
    %192 = vmatpush1.bf16.msra.mxu0 %v167
    %193 = vmatprep.subr.bf16.mxu0 0
    %194 = vmatpush1.bf16.msra.mxu0 %v166
    %195 = vmatprep.subr.bf16.mxu0 0
    %196 = vmatpush1.bf16.msra.mxu0 %v165
    %197 = vmatprep.subr.bf16.mxu0 0
    %198 = vmatpush2.bf16.msra.mxu0 0
    %199 = vmatprep.subr.bf16.mxu0 0
    %200 = vmatpush2.bf16.msra.mxu0 0
    %201 = vmatprep.subr.bf16.mxu0 0
    %202 = vmatpush2.bf16.msra.mxu0 0
    %203 = vmatprep.subr.bf16.mxu0 0
    %204 = vmatpush2.bf16.msra.mxu0 0
    %205 = vmatprep.subr.bf16.mxu0 0
    %206 = vmatpush2.bf16.msra.mxu0 0
    %207 = vmatprep.subr.bf16.mxu0 0
    %208 = vmatpush2.bf16.msra.mxu0 0
    %209 = vmatprep.subr.bf16.mxu0 0
    %210 = vmatpush2.bf16.msra.mxu0 0
    %211 = vmatprep.subr.bf16.mxu0 0
    %212 = vmatpush2.bf16.msra.mxu0 0
    %213 = vmatprep.mubr.bf16.mxu0 0
    %214 = vmatmul.mubr.bf16.gmra.mxu0 %v93
    %v215 = vpop.f32.mrf.mxu0
    %v216 = vadd.f32 0.0, %v215
    %v217 = vpop.f32.mrf.mxu0
    %v218 = vpop.f32.mrf.mxu0
    %v219 = vadd.f32 0.0, %v218
    %v220 = vpop.f32.mrf.mxu0
    %221 = vmatprep.mubr.bf16.mxu0 0
    %222 = vmatmul.mubr.bf16.gmra.mxu0 %v94
    %v223 = vpop.f32.mrf.mxu0
    %v224 = vadd.f32 0.0, %v223
    %v225 = vpop.f32.mrf.mxu0
    %v226 = vpop.f32.mrf.mxu0
    %v227 = vadd.f32 0.0, %v226
    %v228 = vpop.f32.mrf.mxu0
    %229 = vmatprep.mubr.bf16.mxu0 0
    %230 = vmatmul.mubr.bf16.gmra.mxu0 %v95
    %v231 = vpop.f32.mrf.mxu0
    %v232 = vadd.f32 0.0, %v231
    %v233 = vpop.f32.mrf.mxu0
    %v234 = vpop.f32.mrf.mxu0
    %v235 = vadd.f32 0.0, %v234
    %v236 = vpop.f32.mrf.mxu0
    %237 = vmatprep.mubr.bf16.mxu0 0
    %238 = vmatmul.mubr.bf16.gmra.mxu0 %v96
    %v239 = vpop.f32.mrf.mxu0
    %v240 = vadd.f32 0.0, %v239
    %v241 = vpop.f32.mrf.mxu0
    %v242 = vpop.f32.mrf.mxu0
    %v243 = vadd.f32 0.0, %v242
    %v244 = vpop.f32.mrf.mxu0
    %245 = vmatprep.mubr.bf16.mxu0 0
    %246 = vmatmul.mubr.bf16.gmra.mxu0 %v97
    %v247 = vpop.f32.mrf.mxu0
    %v248 = vadd.f32 0.0, %v247
    %v249 = vpop.f32.mrf.mxu0
    %v250 = vpop.f32.mrf.mxu0
    %v251 = vadd.f32 0.0, %v250
    %v252 = vpop.f32.mrf.mxu0
    %253 = vmatprep.mubr.bf16.mxu0 0
    %254 = vmatmul.mubr.bf16.gmra.mxu0 %v98
    %v255 = vpop.f32.mrf.mxu0
    %v256 = vadd.f32 0.0, %v255
    %v257 = vpop.f32.mrf.mxu0
    %v258 = vpop.f32.mrf.mxu0
    %v259 = vadd.f32 0.0, %v258
    %v260 = vpop.f32.mrf.mxu0
    %261 = vmatprep.mubr.bf16.mxu0 0
    %262 = vmatmul.mubr.bf16.gmra.mxu0 %v99
    %v263 = vpop.f32.mrf.mxu0
    %v264 = vadd.f32 0.0, %v263
    %v265 = vpop.f32.mrf.mxu0
    %v266 = vpop.f32.mrf.mxu0
    %v267 = vadd.f32 0.0, %v266
    %v268 = vpop.f32.mrf.mxu0
    %269 = vmatprep.mubr.bf16.mxu0 0
    %270 = vmatmul.mubr.bf16.gmra.mxu0 %v100
    %v271 = vpop.f32.mrf.mxu0
    %v272 = vadd.f32 0.0, %v271
    %v273 = vpop.f32.mrf.mxu0
    %v274 = vpop.f32.mrf.mxu0
    %v275 = vadd.f32 0.0, %v274
    %v276 = vpop.f32.mrf.mxu0
    %277 = vdwg.mxu0
    %v278 = vadd.f32 %v101, %v216
    %v279 = vadd.f32 %v102, %v219
    %v280 = vadd.f32 %v103, %v224
    %v281 = vadd.f32 %v104, %v227
    %v282 = vadd.f32 %v105, %v232
    %v283 = vadd.f32 %v106, %v235
    %v284 = vadd.f32 %v107, %v240
    %v285 = vadd.f32 %v108, %v243
    %v286 = vadd.f32 %v109, %v248
    %v287 = vadd.f32 %v110, %v251
    %v288 = vadd.f32 %v111, %v256
    %v289 = vadd.f32 %v112, %v259
    %v290 = vadd.f32 %v113, %v264
    %v291 = vadd.f32 %v114, %v267
    %v292 = vadd.f32 %v115, %v272
    %v293 = vadd.f32 %v116, %v275
    %294 = vst [vmem:[#allocation2] sm:$0xff] %v278
    %295 = vst [vmem:[#allocation2 + $0x8] sm:$0xff] %v279
    %296 = vst [vmem:[#allocation2 + $0x10] sm:$0xff] %v280
    %297 = vst [vmem:[#allocation2 + $0x18] sm:$0xff] %v281
    %298 = vst [vmem:[#allocation2 + $0x20] sm:$0xff] %v282
    %299 = vst [vmem:[#allocation2 + $0x28] sm:$0xff] %v283
    %300 = vst [vmem:[#allocation2 + $0x30] sm:$0xff] %v284
    %301 = vst [vmem:[#allocation2 + $0x38] sm:$0xff] %v285
    %302 = vst [vmem:[#allocation2 + $0x40] sm:$0xff] %v286
    %303 = vst [vmem:[#allocation2 + $0x48] sm:$0xff] %v287
    %304 = vst [vmem:[#allocation2 + $0x50] sm:$0xff] %v288
    %305 = vst [vmem:[#allocation2 + $0x58] sm:$0xff] %v289
    %306 = vst [vmem:[#allocation2 + $0x60] sm:$0xff] %v290
    %307 = vst [vmem:[#allocation2 + $0x68] sm:$0xff] %v291
    %308 = vst [vmem:[#allocation2 + $0x70] sm:$0xff] %v292
    %309 = vst [vmem:[#allocation2 + $0x78] sm:$0xff] %v293
    // Predicated region
    $region46: #{tpu_custom_call.1} parent=1 // pred_check
      %p310 = pneg %p69
    $region47: #{tpu_custom_call.1} parent=1 // pred_check_branch
      %312 = sbr.rel (%p310) target = $region49
    $region48: #{tpu_custom_call.1} parent=1 // pred_region
      %v313 = vld [vmem:[#allocation2] sm:$0xff]
      %v314 = vld [vmem:[#allocation2 + $0x8] sm:$0xff]
      %v315 = vld [vmem:[#allocation2 + $0x10] sm:$0xff]
      %v316 = vld [vmem:[#allocation2 + $0x18] sm:$0xff]
      %v317 = vld [vmem:[#allocation2 + $0x20] sm:$0xff]
      %v318 = vld [vmem:[#allocation2 + $0x28] sm:$0xff]
      %v319 = vld [vmem:[#allocation2 + $0x30] sm:$0xff]
      %v320 = vld [vmem:[#allocation2 + $0x38] sm:$0xff]
      %v321 = vld [vmem:[#allocation2 + $0x40] sm:$0xff]
      %v322 = vld [vmem:[#allocation2 + $0x48] sm:$0xff]
      %v323 = vld [vmem:[#allocation2 + $0x50] sm:$0xff]
      %v324 = vld [vmem:[#allocation2 + $0x58] sm:$0xff]
      %v325 = vld [vmem:[#allocation2 + $0x60] sm:$0xff]
      %v326 = vld [vmem:[#allocation2 + $0x68] sm:$0xff]
      %v327 = vld [vmem:[#allocation2 + $0x70] sm:$0xff]
      %v328 = vld [vmem:[#allocation2 + $0x78] sm:$0xff]
      %v329 = vld [vmem:[%s3] sm:$0xff]
      %v330 = vld [vmem:[%s3 + $0x8] sm:$0xff]
      %v331 = vld [vmem:[%s3 + $0x10] sm:$0xff]
      %v332 = vld [vmem:[%s3 + $0x18] sm:$0xff]
      %v333 = vld [vmem:[%s3 + $0x20] sm:$0xff]
      %v334 = vld [vmem:[%s3 + $0x28] sm:$0xff]
      %v335 = vld [vmem:[%s3 + $0x30] sm:$0xff]
      %v336 = vld [vmem:[%s3 + $0x38] sm:$0xff]
      %v337 = vld [vmem:[%s3 + $0x40] sm:$0xff]
      %v338 = vld [vmem:[%s3 + $0x48] sm:$0xff]
      %v339 = vld [vmem:[%s3 + $0x50] sm:$0xff]
      %v340 = vld [vmem:[%s3 + $0x58] sm:$0xff]
      %v341 = vld [vmem:[%s3 + $0x60] sm:$0xff]
      %v342 = vld [vmem:[%s3 + $0x68] sm:$0xff]
      %v343 = vld [vmem:[%s3 + $0x70] sm:$0xff]
      %v344 = vld [vmem:[%s3 + $0x78] sm:$0xff]
      %346 = vset.pattern.permute.xlu0 0
      %347 = vperm.xlu0 %346, %v329
      %v348 = vpop.permute.xlu0 %347
      %351 = vset.pattern.permute.xlu0 0
      %352 = vperm.xlu0 %351, %v330
      %v353 = vpop.permute.xlu0 %352
      %356 = vset.pattern.permute.xlu0 0
      %357 = vperm.xlu0 %356, %v331
      %v358 = vpop.permute.xlu0 %357
      %361 = vset.pattern.permute.xlu0 0
      %362 = vperm.xlu0 %361, %v332
      %v363 = vpop.permute.xlu0 %362
      %366 = vset.pattern.permute.xlu0 0
      %367 = vperm.xlu0 %366, %v333
      %v368 = vpop.permute.xlu0 %367
      %371 = vset.pattern.permute.xlu0 0
      %372 = vperm.xlu0 %371, %v334
      %v373 = vpop.permute.xlu0 %372
      %376 = vset.pattern.permute.xlu0 0
      %377 = vperm.xlu0 %376, %v335
      %v378 = vpop.permute.xlu0 %377
      %381 = vset.pattern.permute.xlu0 0
      %382 = vperm.xlu0 %381, %v336
      %v383 = vpop.permute.xlu0 %382
      %386 = vset.pattern.permute.xlu0 0
      %387 = vperm.xlu0 %386, %v337
      %v388 = vpop.permute.xlu0 %387
      %391 = vset.pattern.permute.xlu0 0
      %392 = vperm.xlu0 %391, %v338
      %v393 = vpop.permute.xlu0 %392
      %396 = vset.pattern.permute.xlu0 0
      %397 = vperm.xlu0 %396, %v339
      %v398 = vpop.permute.xlu0 %397
      %401 = vset.pattern.permute.xlu0 0
      %402 = vperm.xlu0 %401, %v340
      %v403 = vpop.permute.xlu0 %402
      %406 = vset.pattern.permute.xlu0 0
      %407 = vperm.xlu0 %406, %v341
      %v408 = vpop.permute.xlu0 %407
      %411 = vset.pattern.permute.xlu0 0
      %412 = vperm.xlu0 %411, %v342
      %v413 = vpop.permute.xlu0 %412
      %416 = vset.pattern.permute.xlu0 0
      %417 = vperm.xlu0 %416, %v343
      %v418 = vpop.permute.xlu0 %417
      %421 = vset.pattern.permute.xlu0 0
      %422 = vperm.xlu0 %421, %v344
      %v423 = vpop.permute.xlu0 %422
      %v425 = vmul.f32 %v313, %v348
      %v426 = vmul.f32 %v314, %v353
      %v427 = vmul.f32 %v315, %v358
      %v428 = vmul.f32 %v316, %v363
      %v429 = vmul.f32 %v317, %v368
      %v430 = vmul.f32 %v318, %v373
      %v431 = vmul.f32 %v319, %v378
      %v432 = vmul.f32 %v320, %v383
      %v433 = vmul.f32 %v321, %v388
      %v434 = vmul.f32 %v322, %v393
      %v435 = vmul.f32 %v323, %v398
      %v436 = vmul.f32 %v324, %v403
      %v437 = vmul.f32 %v325, %v408
      %v438 = vmul.f32 %v326, %v413
      %v439 = vmul.f32 %v327, %v418
      %v440 = vmul.f32 %v328, %v423
      %v441 = vpack.c.bf16 %v426, %v425
      %v442 = vpack.c.bf16 %v428, %v427
      %v443 = vpack.c.bf16 %v430, %v429
      %v444 = vpack.c.bf16 %v432, %v431
      %v445 = vpack.c.bf16 %v434, %v433
      %v446 = vpack.c.bf16 %v436, %v435
      %v447 = vpack.c.bf16 %v438, %v437
      %v448 = vpack.c.bf16 %v440, %v439
      %v449 = vld [vmem:[#allocation6] sm:$0xf]
      %v450 = vld [vmem:[#allocation6 + $0x4] sm:$0xf]
      %v451 = vld [vmem:[#allocation6 + $0x8] sm:$0xf]
      %v452 = vld [vmem:[#allocation6 + $0xc] sm:$0xf]
      %v453 = vld [vmem:[#allocation6 + $0x10] sm:$0xf]
      %v454 = vld [vmem:[#allocation6 + $0x14] sm:$0xf]
      %v455 = vld [vmem:[#allocation6 + $0x18] sm:$0xf]
      %v456 = vld [vmem:[#allocation6 + $0x1c] sm:$0xf]
      %v457 = vld [vmem:[#allocation6 + $0x20] sm:$0xf]
      %v458 = vld [vmem:[#allocation6 + $0x24] sm:$0xf]
      %v459 = vld [vmem:[#allocation6 + $0x28] sm:$0xf]
      %v460 = vld [vmem:[#allocation6 + $0x2c] sm:$0xf]
      %v461 = vld [vmem:[#allocation6 + $0x30] sm:$0xf]
      %v462 = vld [vmem:[#allocation6 + $0x34] sm:$0xf]
      %v463 = vld [vmem:[#allocation6 + $0x38] sm:$0xf]
      %v464 = vld [vmem:[#allocation6 + $0x3c] sm:$0xf]
      %v465 = vld [vmem:[%s2] sm:$0xf]
      %v466 = vld [vmem:[%s2 + $0x4] sm:$0xf]
      %v467 = vld [vmem:[%s2 + $0x8] sm:$0xf]
      %v468 = vld [vmem:[%s2 + $0xc] sm:$0xf]
      %v469 = vld [vmem:[%s2 + $0x10] sm:$0xf]
      %v470 = vld [vmem:[%s2 + $0x14] sm:$0xf]
      %v471 = vld [vmem:[%s2 + $0x18] sm:$0xf]
      %v472 = vld [vmem:[%s2 + $0x1c] sm:$0xf]
      %v473 = vld [vmem:[%s2 + $0x20] sm:$0xf]
      %v474 = vld [vmem:[%s2 + $0x24] sm:$0xf]
      %v475 = vld [vmem:[%s2 + $0x28] sm:$0xf]
      %v476 = vld [vmem:[%s2 + $0x2c] sm:$0xf]
      %v477 = vld [vmem:[%s2 + $0x30] sm:$0xf]
      %v478 = vld [vmem:[%s2 + $0x34] sm:$0xf]
      %v479 = vld [vmem:[%s2 + $0x38] sm:$0xf]
      %v480 = vld [vmem:[%s2 + $0x3c] sm:$0xf]
      %v481 = vld [vmem:[#allocation8] sm:$0xf]
      %v482 = vld [vmem:[#allocation8 + $0x4] sm:$0xf]
      %v483 = vld [vmem:[#allocation8 + $0x8] sm:$0xf]
      %v484 = vld [vmem:[#allocation8 + $0xc] sm:$0xf]
      %v485 = vld [vmem:[#allocation8 + $0x10] sm:$0xf]
      %v486 = vld [vmem:[#allocation8 + $0x14] sm:$0xf]
      %v487 = vld [vmem:[#allocation8 + $0x18] sm:$0xf]
      %v488 = vld [vmem:[#allocation8 + $0x1c] sm:$0xf]
      %v489 = vld [vmem:[#allocation8 + $0x20] sm:$0xf]
      %v490 = vld [vmem:[#allocation8 + $0x24] sm:$0xf]
      %v491 = vld [vmem:[#allocation8 + $0x28] sm:$0xf]
      %v492 = vld [vmem:[#allocation8 + $0x2c] sm:$0xf]
      %v493 = vld [vmem:[#allocation8 + $0x30] sm:$0xf]
      %v494 = vld [vmem:[#allocation8 + $0x34] sm:$0xf]
      %v495 = vld [vmem:[#allocation8 + $0x38] sm:$0xf]
      %v496 = vld [vmem:[#allocation8 + $0x3c] sm:$0xf]
      %v513 = vunpack.c.l.b16 %v465
      %v514 = vunpack.c.l.b16 %v466
      %v515 = vunpack.c.l.b16 %v467
      %v516 = vunpack.c.l.b16 %v468
      %v517 = vunpack.c.l.b16 %v469
      %v518 = vunpack.c.l.b16 %v470
      %v519 = vunpack.c.l.b16 %v471
      %v520 = vunpack.c.l.b16 %v472
      %v521 = vunpack.c.l.b16 %v473
      %v522 = vunpack.c.l.b16 %v474
      %v523 = vunpack.c.l.b16 %v475
      %v524 = vunpack.c.l.b16 %v476
      %v525 = vunpack.c.l.b16 %v477
      %v526 = vunpack.c.l.b16 %v478
      %v527 = vunpack.c.l.b16 %v479
      %v528 = vunpack.c.l.b16 %v480
      %v529 = vpack.c.b16 %v514, %v513
      %v530 = vpack.c.b16 %v516, %v515
      %v531 = vpack.c.b16 %v518, %v517
      %v532 = vpack.c.b16 %v520, %v519
      %v533 = vpack.c.b16 %v522, %v521
      %v534 = vpack.c.b16 %v524, %v523
      %v535 = vpack.c.b16 %v526, %v525
      %v536 = vpack.c.b16 %v528, %v527
      %v561 = vunpack.c.l.b16 %v481
      %v562 = vunpack.c.l.b16 %v482
      %v563 = vunpack.c.l.b16 %v483
      %v564 = vunpack.c.l.b16 %v484
      %v565 = vunpack.c.l.b16 %v485
      %v566 = vunpack.c.l.b16 %v486
      %v567 = vunpack.c.l.b16 %v487
      %v568 = vunpack.c.l.b16 %v488
      %v569 = vunpack.c.l.b16 %v489
      %v570 = vunpack.c.l.b16 %v490
      %v571 = vunpack.c.l.b16 %v491
      %v572 = vunpack.c.l.b16 %v492
      %v573 = vunpack.c.l.b16 %v493
      %v574 = vunpack.c.l.b16 %v494
      %v575 = vunpack.c.l.b16 %v495
      %v576 = vunpack.c.l.b16 %v496
      %v577 = vpack.c.b16 %v562, %v561
      %v578 = vpack.c.b16 %v564, %v563
      %v579 = vpack.c.b16 %v566, %v565
      %v580 = vpack.c.b16 %v568, %v567
      %v581 = vpack.c.b16 %v570, %v569
      %v582 = vpack.c.b16 %v572, %v571
      %v583 = vpack.c.b16 %v574, %v573
      %v584 = vpack.c.b16 %v576, %v575
      %593 = vmatprep.subr.bf16.mxu0 0
      %594 = vmatpush1.bf16.msra.mxu0 %v584
      %595 = vmatprep.subr.bf16.mxu0 0
      %596 = vmatpush1.bf16.msra.mxu0 %v583
      %597 = vmatprep.subr.bf16.mxu0 0
      %598 = vmatpush1.bf16.msra.mxu0 %v582
      %599 = vmatprep.subr.bf16.mxu0 0
      %600 = vmatpush1.bf16.msra.mxu0 %v581
      %601 = vmatprep.subr.bf16.mxu0 0
      %602 = vmatpush1.bf16.msra.mxu0 %v580
      %603 = vmatprep.subr.bf16.mxu0 0
      %604 = vmatpush1.bf16.msra.mxu0 %v579
      %605 = vmatprep.subr.bf16.mxu0 0
      %606 = vmatpush1.bf16.msra.mxu0 %v578
      %607 = vmatprep.subr.bf16.mxu0 0
      %608 = vmatpush1.bf16.msra.mxu0 %v577
      %609 = vmatprep.subr.bf16.mxu0 0
      %610 = vmatpush2.bf16.msra.mxu0 0
      %611 = vmatprep.subr.bf16.mxu0 0
      %612 = vmatpush2.bf16.msra.mxu0 0
      %613 = vmatprep.subr.bf16.mxu0 0
      %614 = vmatpush2.bf16.msra.mxu0 0
      %615 = vmatprep.subr.bf16.mxu0 0
      %616 = vmatpush2.bf16.msra.mxu0 0
      %617 = vmatprep.subr.bf16.mxu0 0
      %618 = vmatpush2.bf16.msra.mxu0 0
      %619 = vmatprep.subr.bf16.mxu0 0
      %620 = vmatpush2.bf16.msra.mxu0 0
      %621 = vmatprep.subr.bf16.mxu0 0
      %622 = vmatpush2.bf16.msra.mxu0 0
      %623 = vmatprep.subr.bf16.mxu0 0
      %624 = vmatpush2.bf16.msra.mxu0 0
      %625 = vmatprep.mubr.bf16.mxu0 0
      %626 = vmatmul.mubr.bf16.gmra.mxu0 %v529
      %v627 = vpop.f32.mrf.mxu0
      %v628 = vadd.f32 0.0, %v627
      %v629 = vpop.f32.mrf.mxu0
      %v630 = vpop.f32.mrf.mxu0
      %v631 = vadd.f32 0.0, %v630
      %v632 = vpop.f32.mrf.mxu0
      %633 = vmatprep.mubr.bf16.mxu0 0
      %634 = vmatmul.mubr.bf16.gmra.mxu0 %v530
      %v635 = vpop.f32.mrf.mxu0
      %v636 = vadd.f32 0.0, %v635
      %v637 = vpop.f32.mrf.mxu0
      %v638 = vpop.f32.mrf.mxu0
      %v639 = vadd.f32 0.0, %v638
      %v640 = vpop.f32.mrf.mxu0
      %641 = vmatprep.mubr.bf16.mxu0 0
      %642 = vmatmul.mubr.bf16.gmra.mxu0 %v531
      %v643 = vpop.f32.mrf.mxu0
      %v644 = vadd.f32 0.0, %v643
      %v645 = vpop.f32.mrf.mxu0
      %v646 = vpop.f32.mrf.mxu0
      %v647 = vadd.f32 0.0, %v646
      %v648 = vpop.f32.mrf.mxu0
      %649 = vmatprep.mubr.bf16.mxu0 0
      %650 = vmatmul.mubr.bf16.gmra.mxu0 %v532
      %v651 = vpop.f32.mrf.mxu0
      %v652 = vadd.f32 0.0, %v651
      %v653 = vpop.f32.mrf.mxu0
      %v654 = vpop.f32.mrf.mxu0
      %v655 = vadd.f32 0.0, %v654
      %v656 = vpop.f32.mrf.mxu0
      %657 = vmatprep.mubr.bf16.mxu0 0
      %658 = vmatmul.mubr.bf16.gmra.mxu0 %v533
      %v659 = vpop.f32.mrf.mxu0
      %v660 = vadd.f32 0.0, %v659
      %v661 = vpop.f32.mrf.mxu0
      %v662 = vpop.f32.mrf.mxu0
      %v663 = vadd.f32 0.0, %v662
      %v664 = vpop.f32.mrf.mxu0
      %665 = vmatprep.mubr.bf16.mxu0 0
      %666 = vmatmul.mubr.bf16.gmra.mxu0 %v534
      %v667 = vpop.f32.mrf.mxu0
      %v668 = vadd.f32 0.0, %v667
      %v669 = vpop.f32.mrf.mxu0
      %v670 = vpop.f32.mrf.mxu0
      %v671 = vadd.f32 0.0, %v670
      %v672 = vpop.f32.mrf.mxu0
      %673 = vmatprep.mubr.bf16.mxu0 0
      %674 = vmatmul.mubr.bf16.gmra.mxu0 %v535
      %v675 = vpop.f32.mrf.mxu0
      %v676 = vadd.f32 0.0, %v675
      %v677 = vpop.f32.mrf.mxu0
      %v678 = vpop.f32.mrf.mxu0
      %v679 = vadd.f32 0.0, %v678
      %v680 = vpop.f32.mrf.mxu0
      %681 = vmatprep.mubr.bf16.mxu0 0
      %682 = vmatmul.mubr.bf16.gmra.mxu0 %v536
      %v683 = vpop.f32.mrf.mxu0
      %v684 = vadd.f32 0.0, %v683
      %v685 = vpop.f32.mrf.mxu0
      %v686 = vpop.f32.mrf.mxu0
      %v687 = vadd.f32 0.0, %v686
      %v688 = vpop.f32.mrf.mxu0
      %689 = vdwg.mxu0
      %v706 = vunpack.c.l.b16 %v449
      %v707 = vunpack.c.l.b16 %v450
      %v708 = vunpack.c.l.b16 %v451
      %v709 = vunpack.c.l.b16 %v452
      %v710 = vunpack.c.l.b16 %v453
      %v711 = vunpack.c.l.b16 %v454
      %v712 = vunpack.c.l.b16 %v455
      %v713 = vunpack.c.l.b16 %v456
      %v714 = vunpack.c.l.b16 %v457
      %v715 = vunpack.c.l.b16 %v458
      %v716 = vunpack.c.l.b16 %v459
      %v717 = vunpack.c.l.b16 %v460
      %v718 = vunpack.c.l.b16 %v461
      %v719 = vunpack.c.l.b16 %v462
      %v720 = vunpack.c.l.b16 %v463
      %v721 = vunpack.c.l.b16 %v464
      %v722 = vpack.c.b16 %v707, %v706
      %v723 = vpack.c.b16 %v709, %v708
      %v724 = vpack.c.b16 %v711, %v710
      %v725 = vpack.c.b16 %v713, %v712
      %v726 = vpack.c.b16 %v715, %v714
      %v727 = vpack.c.b16 %v717, %v716
      %v728 = vpack.c.b16 %v719, %v718
      %v729 = vpack.c.b16 %v721, %v720
      %738 = vmatprep.subr.bf16.mxu0 0
      %739 = vmatpush1.bf16.msra.mxu0 %v729
      %740 = vmatprep.subr.bf16.mxu0 0
      %741 = vmatpush1.bf16.msra.mxu0 %v728
      %742 = vmatprep.subr.bf16.mxu0 0
      %743 = vmatpush1.bf16.msra.mxu0 %v727
      %744 = vmatprep.subr.bf16.mxu0 0
      %745 = vmatpush1.bf16.msra.mxu0 %v726
      %746 = vmatprep.subr.bf16.mxu0 0
      %747 = vmatpush1.bf16.msra.mxu0 %v725
      %748 = vmatprep.subr.bf16.mxu0 0
      %749 = vmatpush1.bf16.msra.mxu0 %v724
      %750 = vmatprep.subr.bf16.mxu0 0
      %751 = vmatpush1.bf16.msra.mxu0 %v723
      %752 = vmatprep.subr.bf16.mxu0 0
      %753 = vmatpush1.bf16.msra.mxu0 %v722
      %754 = vmatprep.subr.bf16.mxu0 0
      %755 = vmatpush2.bf16.msra.mxu0 0
      %756 = vmatprep.subr.bf16.mxu0 0
      %757 = vmatpush2.bf16.msra.mxu0 0
      %758 = vmatprep.subr.bf16.mxu0 0
      %759 = vmatpush2.bf16.msra.mxu0 0
      %760 = vmatprep.subr.bf16.mxu0 0
      %761 = vmatpush2.bf16.msra.mxu0 0
      %762 = vmatprep.subr.bf16.mxu0 0
      %763 = vmatpush2.bf16.msra.mxu0 0
      %764 = vmatprep.subr.bf16.mxu0 0
      %765 = vmatpush2.bf16.msra.mxu0 0
      %766 = vmatprep.subr.bf16.mxu0 0
      %767 = vmatpush2.bf16.msra.mxu0 0
      %768 = vmatprep.subr.bf16.mxu0 0
      %769 = vmatpush2.bf16.msra.mxu0 0
      %770 = vmatprep.mubr.bf16.mxu0 0
      %771 = vmatmul.mubr.bf16.gmra.mxu0 %v441
      %v772 = vpop.f32.mrf.mxu0
      %v773 = vadd.f32 %v628, %v772
      %v774 = vpop.f32.mrf.mxu0
      %v775 = vpop.f32.mrf.mxu0
      %v776 = vadd.f32 %v631, %v775
      %v777 = vpop.f32.mrf.mxu0
      %778 = vmatprep.mubr.bf16.mxu0 0
      %779 = vmatmul.mubr.bf16.gmra.mxu0 %v442
      %v780 = vpop.f32.mrf.mxu0
      %v781 = vadd.f32 %v636, %v780
      %v782 = vpop.f32.mrf.mxu0
      %v783 = vpop.f32.mrf.mxu0
      %v784 = vadd.f32 %v639, %v783
      %v785 = vpop.f32.mrf.mxu0
      %786 = vmatprep.mubr.bf16.mxu0 0
      %787 = vmatmul.mubr.bf16.gmra.mxu0 %v443
      %v788 = vpop.f32.mrf.mxu0
      %v789 = vadd.f32 %v644, %v788
      %v790 = vpop.f32.mrf.mxu0
      %v791 = vpop.f32.mrf.mxu0
      %v792 = vadd.f32 %v647, %v791
      %v793 = vpop.f32.mrf.mxu0
      %794 = vmatprep.mubr.bf16.mxu0 0
      %795 = vmatmul.mubr.bf16.gmra.mxu0 %v444
      %v796 = vpop.f32.mrf.mxu0
      %v797 = vadd.f32 %v652, %v796
      %v798 = vpop.f32.mrf.mxu0
      %v799 = vpop.f32.mrf.mxu0
      %v800 = vadd.f32 %v655, %v799
      %v801 = vpop.f32.mrf.mxu0
      %802 = vmatprep.mubr.bf16.mxu0 0
      %803 = vmatmul.mubr.bf16.gmra.mxu0 %v445
      %v804 = vpop.f32.mrf.mxu0
      %v805 = vadd.f32 %v660, %v804
      %v806 = vpop.f32.mrf.mxu0
      %v807 = vpop.f32.mrf.mxu0
      %v808 = vadd.f32 %v663, %v807
      %v809 = vpop.f32.mrf.mxu0
      %810 = vmatprep.mubr.bf16.mxu0 0
      %811 = vmatmul.mubr.bf16.gmra.mxu0 %v446
      %v812 = vpop.f32.mrf.mxu0
      %v813 = vadd.f32 %v668, %v812
      %v814 = vpop.f32.mrf.mxu0
      %v815 = vpop.f32.mrf.mxu0
      %v816 = vadd.f32 %v671, %v815
      %v817 = vpop.f32.mrf.mxu0
      %818 = vmatprep.mubr.bf16.mxu0 0
      %819 = vmatmul.mubr.bf16.gmra.mxu0 %v447
      %v820 = vpop.f32.mrf.mxu0
      %v821 = vadd.f32 %v676, %v820
      %v822 = vpop.f32.mrf.mxu0
      %v823 = vpop.f32.mrf.mxu0
      %v824 = vadd.f32 %v679, %v823
      %v825 = vpop.f32.mrf.mxu0
      %826 = vmatprep.mubr.bf16.mxu0 0
      %827 = vmatmul.mubr.bf16.gmra.mxu0 %v448
      %v828 = vpop.f32.mrf.mxu0
      %v829 = vadd.f32 %v684, %v828
      %v830 = vpop.f32.mrf.mxu0
      %v831 = vpop.f32.mrf.mxu0
      %v832 = vadd.f32 %v687, %v831
      %v833 = vpop.f32.mrf.mxu0
      %834 = vdwg.mxu0
      %v835 = vld [vmem:[%s6] sm:$0x1]
      %v837 = vlaneseq
      %v838 = vshrl.u32 %v837, 7
      %v839 = vsub.s32 0, %v838
      %v840 = vrot.slane %v835, %v839
      %v842 = vadd.f32 %v773, %v840
      %v843 = vadd.f32 %v776, %v840
      %v844 = vadd.f32 %v781, %v840
      %v845 = vadd.f32 %v784, %v840
      %v846 = vadd.f32 %v789, %v840
      %v847 = vadd.f32 %v792, %v840
      %v848 = vadd.f32 %v797, %v840
      %v849 = vadd.f32 %v800, %v840
      %v850 = vadd.f32 %v805, %v840
      %v851 = vadd.f32 %v808, %v840
      %v852 = vadd.f32 %v813, %v840
      %v853 = vadd.f32 %v816, %v840
      %v854 = vadd.f32 %v821, %v840
      %v855 = vadd.f32 %v824, %v840
      %v856 = vadd.f32 %v829, %v840
      %v857 = vadd.f32 %v832, %v840
      %vm858 = vcmp.ge.f32.partialorder %v842, 0.0
      %vm859 = vcmp.ge.f32.partialorder %v843, 0.0
      %vm860 = vcmp.ge.f32.partialorder %v844, 0.0
      %vm861 = vcmp.ge.f32.partialorder %v845, 0.0
      %vm862 = vcmp.ge.f32.partialorder %v846, 0.0
      %vm863 = vcmp.ge.f32.partialorder %v847, 0.0
      %vm864 = vcmp.ge.f32.partialorder %v848, 0.0
      %vm865 = vcmp.ge.f32.partialorder %v849, 0.0
      %vm866 = vcmp.ge.f32.partialorder %v850, 0.0
      %vm867 = vcmp.ge.f32.partialorder %v851, 0.0
      %vm868 = vcmp.ge.f32.partialorder %v852, 0.0
      %vm869 = vcmp.ge.f32.partialorder %v853, 0.0
      %vm870 = vcmp.ge.f32.partialorder %v854, 0.0
      %vm871 = vcmp.ge.f32.partialorder %v855, 0.0
      %vm872 = vcmp.ge.f32.partialorder %v856, 0.0
      %vm873 = vcmp.ge.f32.partialorder %v857, 0.0
      %v874 = vmul.f32 %v842, 0.01
      %v875 = vmul.f32 %v843, 0.01
      %v876 = vmul.f32 %v844, 0.01
      %v877 = vmul.f32 %v845, 0.01
      %v878 = vmul.f32 %v846, 0.01
      %v879 = vmul.f32 %v847, 0.01
      %v880 = vmul.f32 %v848, 0.01
      %v881 = vmul.f32 %v849, 0.01
      %v882 = vmul.f32 %v850, 0.01
      %v883 = vmul.f32 %v851, 0.01
      %v884 = vmul.f32 %v852, 0.01
      %v885 = vmul.f32 %v853, 0.01
      %v886 = vmul.f32 %v854, 0.01
      %v887 = vmul.f32 %v855, 0.01
      %v888 = vmul.f32 %v856, 0.01
      %v889 = vmul.f32 %v857, 0.01
      %v890 = vsel %vm858, %v842, %v874
      %v891 = vsel %vm859, %v843, %v875
      %v892 = vsel %vm860, %v844, %v876
      %v893 = vsel %vm861, %v845, %v877
      %v894 = vsel %vm862, %v846, %v878
      %v895 = vsel %vm863, %v847, %v879
      %v896 = vsel %vm864, %v848, %v880
      %v897 = vsel %vm865, %v849, %v881
      %v898 = vsel %vm866, %v850, %v882
      %v899 = vsel %vm867, %v851, %v883
      %v900 = vsel %vm868, %v852, %v884
      %v901 = vsel %vm869, %v853, %v885
      %v902 = vsel %vm870, %v854, %v886
      %v903 = vsel %vm871, %v855, %v887
      %v904 = vsel %vm872, %v856, %v888
      %v905 = vsel %vm873, %v857, %v889
      %v906 = vpack.c.bf16 %v891, %v890
      %v907 = vpack.c.bf16 %v893, %v892
      %v908 = vpack.c.bf16 %v895, %v894
      %v909 = vpack.c.bf16 %v897, %v896
      %v910 = vpack.c.bf16 %v899, %v898
      %v911 = vpack.c.bf16 %v901, %v900
      %v912 = vpack.c.bf16 %v903, %v902
      %v913 = vpack.c.bf16 %v905, %v904
      %v922 = vunpack.c.l.b16 %v906
      %v923 = vunpack.c.h.b16 %v906
      %v924 = vunpack.c.l.b16 %v907
      %v925 = vunpack.c.h.b16 %v907
      %v926 = vunpack.c.l.b16 %v908
      %v927 = vunpack.c.h.b16 %v908
      %v928 = vunpack.c.l.b16 %v909
      %v929 = vunpack.c.h.b16 %v909
      %v930 = vunpack.c.l.b16 %v910
      %v931 = vunpack.c.h.b16 %v910
      %v932 = vunpack.c.l.b16 %v911
      %v933 = vunpack.c.h.b16 %v911
      %v934 = vunpack.c.l.b16 %v912
      %v935 = vunpack.c.h.b16 %v912
      %v936 = vunpack.c.l.b16 %v913
      %v937 = vunpack.c.h.b16 %v913
      %v938 = vpack.c.b16 %v922, %v922
      %v939 = vpack.c.b16 %v923, %v923
      %v940 = vpack.c.b16 %v924, %v924
      %v941 = vpack.c.b16 %v925, %v925
      %v942 = vpack.c.b16 %v926, %v926
      %v943 = vpack.c.b16 %v927, %v927
      %v944 = vpack.c.b16 %v928, %v928
      %v945 = vpack.c.b16 %v929, %v929
      %v946 = vpack.c.b16 %v930, %v930
      %v947 = vpack.c.b16 %v931, %v931
      %v948 = vpack.c.b16 %v932, %v932
      %v949 = vpack.c.b16 %v933, %v933
      %v950 = vpack.c.b16 %v934, %v934
      %v951 = vpack.c.b16 %v935, %v935
      %v952 = vpack.c.b16 %v936, %v936
      %v953 = vpack.c.b16 %v937, %v937
      %970 = vst [vmem:[#allocation9] sm:$0xf] %v938
      %971 = vst [vmem:[#allocation9 + $0x4] sm:$0xf] %v939
      %972 = vst [vmem:[#allocation9 + $0x8] sm:$0xf] %v940
      %973 = vst [vmem:[#allocation9 + $0xc] sm:$0xf] %v941
      %974 = vst [vmem:[#allocation9 + $0x10] sm:$0xf] %v942
      %975 = vst [vmem:[#allocation9 + $0x14] sm:$0xf] %v943
      %976 = vst [vmem:[#allocation9 + $0x18] sm:$0xf] %v944
      %977 = vst [vmem:[#allocation9 + $0x1c] sm:$0xf] %v945
      %978 = vst [vmem:[#allocation9 + $0x20] sm:$0xf] %v946
      %979 = vst [vmem:[#allocation9 + $0x24] sm:$0xf] %v947
      %980 = vst [vmem:[#allocation9 + $0x28] sm:$0xf] %v948
      %981 = vst [vmem:[#allocation9 + $0x2c] sm:$0xf] %v949
      %982 = vst [vmem:[#allocation9 + $0x30] sm:$0xf] %v950
      %983 = vst [vmem:[#allocation9 + $0x34] sm:$0xf] %v951
      %984 = vst [vmem:[#allocation9 + $0x38] sm:$0xf] %v952
      %985 = vst [vmem:[#allocation9 + $0x3c] sm:$0xf] %v953
    $region49: #{tpu_custom_call.1} parent=1 // pred_fallthru
      _
    // Predicated region
    $region50: #{tpu_custom_call.1} parent=1 // pred_check
      _
    $region51: #{tpu_custom_call.1} parent=1 // pred_check_branch
      %987 = sbr.rel (0) target = $region53
    $region52: #{tpu_custom_call.1} parent=1 // pred_region
      %s989 = ssub.s32 1024, 1024
      %990 = vsyncadd [#allocation5], %s989
      %s991 = sshll.u32 [#allocation9], 4
      %s992 = int_to_ptr.vmem [resolvable:$true] %s991
      %997 = dma.vmem_to_hbm [thread:$0]  %s992, 1024, %s7, [#allocation5], 64, 64, 4
    $region53: #{tpu_custom_call.1} parent=1 // pred_fallthru
      _
    // Predicated region
    $region54: #{tpu_custom_call.1} parent=1 // pred_check
      _
    $region55: #{tpu_custom_call.1} parent=1 // pred_check_branch
      %999 = sbr.rel (0) target = $region57
    $region56: #{tpu_custom_call.1} parent=1 // pred_region
      %1000 = dma.done [#allocation5], 1024
    $region57: #{tpu_custom_call.1} parent=1 // pred_fallthru
      _
    %1001 = vsyncpa [#allocation4], 1
    %1002 = vsyncpa [#allocation7], 1
    %1003 = vsyncpa [#allocation5], 1

</llo_original>
